<compile_context>
chip_gen: v6e
topology: v6e:2x2x1
jax: 0.10.0
libtpu: 0.0.40
codegen_flags: <defaults>
</compile_context>

<pallas_src>
import jax
import jax.numpy as jnp
from jax.experimental import pallas as pl
from jax.experimental.pallas import tpu as pltpu


# ---------------------------------------------------------------------------
# Pallas kernel: fused 4-head MLP (transposed layout) + voi combine
# ---------------------------------------------------------------------------
def _make_voi_kernel(tanh_dtype, mxu_dtype):
    def kernel(actT_ref, stT_ref, trow_ref, w1a_ref, w1s_ref, w1t_ref,
               b1_ref, w2_ref, b2_ref, w3_ref, b3_ref, o_ref):
        # Layer 1: (4H, P)@(P, tm) + (4H, S)@(S, tm) + time outer product + bias
        pre1 = (
            jnp.dot(w1a_ref[...], actT_ref[...],
                    preferred_element_type=jnp.float32)
            + jnp.dot(w1s_ref[...], stT_ref[...],
                      preferred_element_type=jnp.float32)
            + w1t_ref[...] * trow_ref[...]          # f32 time feature, exact
            + b1_ref[...]
        )                                            # (4H, tm) f32
        h1 = jnp.tanh(pre1.astype(tanh_dtype))       # bf16 tanh on v6e/v7x

        # Layer 2: block-diagonal (4H, 4H) keeps the heads independent.
        pre2 = (
            jnp.dot(w2_ref[...], h1.astype(mxu_dtype),
                    preferred_element_type=jnp.float32)
            + b2_ref[...]
        )                                            # (4H, tm) f32
        h2 = jnp.tanh(pre2.astype(tanh_dtype))

        # Final head: VPU multiply + sublane reduce (MXU stays free), lane-dense
        # (1, tm) store.
        o_ref[...] = (
            jnp.sum(w3_ref[...] * h2.astype(jnp.float32), axis=0, keepdims=True)
            + b3_ref[...]
        )
    return kernel


# ---------------------------------------------------------------------------
# Parameter packing: 4 heads -> one transposed block-diagonal MLP -> voi
# ---------------------------------------------------------------------------
def pack_voi_params_T(params, influencer_idx, influenced_idx, gamma,
                      num_players, state_size, mxu_dtype=jnp.bfloat16):
    """influencer_idx / influenced_idx / gamma are baked into the packed
    weights (static, as in the PyTorch module which indexes nn.ModuleList);
    re-run this function if they change."""
    P, S = num_players, state_size
    g = float(gamma)
    heads = [
        (params["reward"], False, 1.0),
        (params["q"], False, g),
        (params["cf_reward"][influencer_idx], True, -1.0),
        (params["cf_q"][influencer_idx], True, -g),
    ]

    w1a_l, w1s_l, w1t_l, b1_l, w2_l, b2_l, w3_l, b3_terms = \
        [], [], [], [], [], [], [], []
    for (w1, b1, w2, b2, w3, b3), is_cf, scale in heads:
        if is_cf:
            # cf nets see inputs with the influencer action removed; inserting
            # a zero row at that position lets them consume the joint stream.
            act = w1[:P - 1, :]
            zero = jnp.zeros((1, act.shape[1]), act.dtype)
            act = jnp.concatenate(
                [act[:influencer_idx], zero, act[influencer_idx:]], axis=0)
            st = w1[P - 1:P - 1 + S, :]
            tcol = w1[P - 1 + S:, :]
        else:
            act = w1[:P, :]
            st = w1[P:P + S, :]
            tcol = w1[P + S:, :]
        w1a_l.append(act.T)                                   # (H, P)
        w1s_l.append(st.T)                                    # (H, S)
        w1t_l.append(tcol.T)                                  # (H, 1)
        b1_l.append(b1.T)                                     # (H, 1)
        w2_l.append(w2.T)                                     # (H, H), h2T = W2^T h1T
        b2_l.append(b2.T)                                     # (H, 1)
        w3_l.append(scale * w3[:, influenced_idx:influenced_idx + 1])  # (H, 1)
        b3_terms.append(scale * b3[0, influenced_idx])

    H = w2_l[0].shape[0]
    z = jnp.zeros((H, H), w2_l[0].dtype)
    w2T = jnp.concatenate(
        [jnp.concatenate([w2_l[r] if c == r else z for c in range(4)], axis=1)
         for r in range(4)], axis=0)                          # (4H, 4H) block-diag

    return (
        jnp.concatenate(w1a_l, axis=0).astype(mxu_dtype),     # (4H, P)
        jnp.concatenate(w1s_l, axis=0).astype(mxu_dtype),     # (4H, S)
        jnp.concatenate(w1t_l, axis=0).astype(jnp.float32),   # (4H, 1)
        jnp.concatenate(b1_l, axis=0).astype(jnp.float32),    # (4H, 1)
        w2T.astype(mxu_dtype),                                # (4H, 4H)
        jnp.concatenate(b2_l, axis=0).astype(jnp.float32),    # (4H, 1)
        jnp.concatenate(w3_l, axis=0).astype(jnp.float32),    # (4H, 1)
        sum(b3_terms).astype(jnp.float32).reshape(1, 1),      # (1, 1)
    )


# ---------------------------------------------------------------------------
# Helpers
# ---------------------------------------------------------------------------
def _round_up(v, m):
    return ((v + m - 1) // m) * m


def _default_tanh_dtype():
    # bf16 tanh halves single-slot EUP traffic on v6e/v7x; v5e & older have no
    # bf16 VPU/EUP, so keep the tanh/bias path in f32 there.
    try:
        kind = jax.devices()[0].device_kind.lower()
    except Exception:
        kind = ""
    if "v6" in kind or "v7" in kind:
        return jnp.bfloat16
    return jnp.float32


# ---------------------------------------------------------------------------
# Forward pass (fused Pallas kernel)
# ---------------------------------------------------------------------------
def voi_forward(states, joint_actions, influencer_idx, influenced_idx, params,
                gamma, *, tm_max=2048, mxu_dtype=jnp.bfloat16, tanh_dtype=None):
    if tanh_dtype is None:
        tanh_dtype = _default_tanh_dtype()

    T, bsz, P = joint_actions.shape
    S = 1
    for d in states.shape[2:]:
        S *= d
    n = T * bsz
    hp = params["reward"][2].shape[0] * 4                      # 4 * n_latent_var

    # Fused preprocessing: no (N, din) f32 concat round trip. Transposed bf16
    # streams (features on sublanes, tokens on lanes) + exact f32 time row.
    actT = joint_actions.reshape(n, P).astype(mxu_dtype).T     # (P, N)
    stT = states.reshape(n, S).astype(mxu_dtype).T             # (S, N)
    t_rem = jnp.arange(T - 1, -1, -1, dtype=jnp.float32)
    trow = jnp.broadcast_to(t_rem[:, None], (T, bsz)).reshape(1, n)  # (1, N) f32

    (w1aT, w1sT, w1tT, b1T, w2T, b2T, w3c, b3c) = pack_voi_params_T(
        params, influencer_idx, influenced_idx, gamma, P, S, mxu_dtype)

    # Big tiles amortize ~0.35us/grid-step overhead, but keep ~8 steps when N
    # allows so v7x can shard the "parallel" axis across its 2 TensorCores.
    n_pad = _round_up(n, 128)
    tm = max(128, min(tm_max, _round_up(max(1, n // 8), 128)))
    tm = min(tm, n_pad)
    grid = (pl.cdiv(n, tm),)                                   # ragged tail is masked

    cost = pl.CostEstimate(
        flops=int(2 * n * hp * (P + S + hp) + 6 * n * hp),
        transcendentals=int(2 * n * hp),
        bytes_accessed=int(n * (P + S) * 2 + n * 4 + n * 4
                           + (hp * (P + S + 1 + hp) + 3 * hp + 1) * 4),
    )

    out = pl.pallas_call(
        _make_voi_kernel(tanh_dtype, mxu_dtype),
        out_shape=jax.ShapeDtypeStruct((1, n), jnp.float32),
        grid_spec=pltpu.PrefetchScalarGridSpec(
            num_scalar_prefetch=0,
            grid=grid,
            in_specs=[
                pl.BlockSpec((P, tm), lambda i: (0, i)),       # actions^T tile
                pl.BlockSpec((S, tm), lambda i: (0, i)),       # states^T tile
                pl.BlockSpec((1, tm), lambda i: (0, i)),       # time row (f32)
                pl.BlockSpec((hp, P), lambda i: (0, 0)),       # W1^T action rows
                pl.BlockSpec((hp, S), lambda i: (0, 0)),       # W1^T state rows
                pl.BlockSpec((hp, 1), lambda i: (0, 0)),       # W1^T time col
                pl.BlockSpec((hp, 1), lambda i: (0, 0)),       # b1^T
                pl.BlockSpec((hp, hp), lambda i: (0, 0)),      # block-diag W2^T
                pl.BlockSpec((hp, 1), lambda i: (0, 0)),       # b2^T
                pl.BlockSpec((hp, 1), lambda i: (0, 0)),       # combined W3 column
                pl.BlockSpec((1, 1), lambda i: (0, 0)),        # combined b3
            ],
            out_specs=pl.BlockSpec((1, tm), lambda i: (0, i)),  # lane-dense voi row
        ),
        compiler_params=pltpu.CompilerParams(
            dimension_semantics=("parallel",),
        ),
        cost_estimate=cost,
    )(actT, stT, trow, w1aT, w1sT, w1tT, b1T, w2T, b2T, w3c, b3c)
    return out[0]                                              # (T*bsz,)


# ---------------------------------------------------------------------------
# Pure-JAX reference (mirrors the PyTorch module, f32) for validation
# ---------------------------------------------------------------------------
def _preprocess_ref(states, joint_actions):
    T, bsz = joint_actions.shape[:2]
    time_remaining = jnp.arange(T - 1, -1, -1, dtype=jnp.float32)
    time_remaining = jnp.broadcast_to(time_remaining[:, None], (T, bsz))
    inputs = jnp.concatenate(
        [joint_actions.astype(jnp.float32),
         states.reshape(T, bsz, -1).astype(jnp.float32),
         time_remaining[..., None]],
        axis=-1,
    )
    return inputs.reshape(T * bsz, -1)


def _mlp_ref(x, p):
    w1, b1, w2, b2, w3, b3 = p
    h1 = jnp.tanh(x @ w1 + b1)
    h2 = jnp.tanh(h1 @ w2 + b2)
    return h2 @ w3 + b3


def voi_reference(states, joint_actions, influencer_idx, influenced_idx, params,
                  gamma):
    joint = _preprocess_ref(states, joint_actions)
    marg_actions = jnp.concatenate(
        [joint_actions[..., :influencer_idx],
         joint_actions[..., influencer_idx + 1:]], axis=-1)
    marg = _preprocess_ref(states, marg_actions)
    r = _mlp_ref(joint, params["reward"])[:, influenced_idx]
    q = _mlp_ref(joint, params["q"])[:, influenced_idx]
    cfr = _mlp_ref(marg, params["cf_reward"][influencer_idx])[:, influenced_idx]
    cfq = _mlp_ref(marg, params["cf_q"][influencer_idx])[:, influenced_idx]
    return (r - cfr) + gamma * (q - cfq)


# ---------------------------------------------------------------------------
# Parameter init (PyTorch-style Linear init)
# ---------------------------------------------------------------------------
def init_mlp_params(key, din, h, dout):
    ks = jax.random.split(key, 6)

    def lin(kw, kb, fi, fo):
        bound = 1.0 / jnp.sqrt(jnp.float32(fi))
        w = jax.random.uniform(kw, (fi, fo), jnp.float32, -bound, bound)
        b = jax.random.uniform(kb, (1, fo), jnp.float32, -bound, bound)
        return w, b

    w1, b1 = lin(ks[0], ks[1], din, h)
    w2, b2 = lin(ks[2], ks[3], h, h)
    w3, b3 = lin(ks[4], ks[5], h, dout)
    return (w1, b1, w2, b2, w3, b3)


if __name__ == "__main__":
    num_players = 4
    state_dim = (4, 4)                 # prod = 16
    T, bsz = 8, 2
    n_latent_var = 32                  # packed hidden = 4*32 = 128 (one MXU tile)
    gamma = 0.9
    influencer_idx, influenced_idx = 1, 2

    state_size = 1
    for d in state_dim:
        state_size *= d
    input_dims = num_players + state_size + 1          # 21
    cf_input_dims = num_players - 1 + state_size + 1   # 20
    scalar_output_dims = num_players                   # 4

    key = jax.random.PRNGKey(0)
    k_states, k_actions, k_r, k_q, k_cfr, k_cfq = jax.random.split(key, 6)

    states = jax.random.normal(k_states, (T, bsz) + state_dim, jnp.float32)
    joint_actions = jax.random.randint(
        k_actions, (T, bsz, num_players), 0, 5).astype(jnp.int32)

    params = {
        "reward": init_mlp_params(k_r, input_dims, n_latent_var, scalar_output_dims),
        "q": init_mlp_params(k_q, input_dims, n_latent_var, scalar_output_dims),
        "cf_reward": [
            init_mlp_params(kk, cf_input_dims, n_latent_var, scalar_output_dims)
            for kk in jax.random.split(k_cfr, num_players)
        ],
        "cf_q": [
            init_mlp_params(kk, cf_input_dims, n_latent_var, scalar_output_dims)
            for kk in jax.random.split(k_cfq, num_players)
        ],
    }

    voi = voi_forward(states, joint_actions, influencer_idx, influenced_idx,
                      params, gamma)
    voi = jax.block_until_ready(voi)

    assert voi.shape == (T * bsz,)
    assert bool(jnp.all(jnp.isfinite(voi)))

    # Validate against the f32 semantic reference (loosened tolerance because
    # the kernel uses bf16 MXU operands, and bf16 tanh on v6e/v7x).
    ref = voi_reference(states, joint_actions, influencer_idx, influenced_idx,
                        params, gamma)
    max_err = float(jnp.max(jnp.abs(voi - ref)))
    assert bool(jnp.allclose(voi, ref, atol=1e-1, rtol=1e-1)), (
        f"max abs err {max_err}")

    print("KERNEL_OK")
</pallas_src>

<mosaic_0001>
module attributes {stable_mosaic.version = 11 : i64} {
  func.func @kernel(%arg0: i32, %arg1: memref<4x128xbf16, #tpu.memory_space<vmem>>, %arg2: memref<16x128xbf16, #tpu.memory_space<vmem>>, %arg3: memref<1x128xf32, #tpu.memory_space<vmem>>, %arg4: memref<128x4xbf16, #tpu.memory_space<vmem>>, %arg5: memref<128x16xbf16, #tpu.memory_space<vmem>>, %arg6: memref<128x1xf32, #tpu.memory_space<vmem>>, %arg7: memref<128x1xf32, #tpu.memory_space<vmem>>, %arg8: memref<128x128xbf16, #tpu.memory_space<vmem>>, %arg9: memref<128x1xf32, #tpu.memory_space<vmem>>, %arg10: memref<128x1xf32, #tpu.memory_space<vmem>>, %arg11: memref<1x1xf32, #tpu.memory_space<vmem>>, %arg12: memref<1x128xf32, #tpu.memory_space<vmem>>) attributes {dimension_semantics = [#tpu.dimension_semantics<parallel>], iteration_bounds = array<i64: 1>, scalar_prefetch = 0 : i64, scratch_operands = 0 : i64, tpu.core_type = #tpu.core_type<tc>, window_params = [{transform_indices = @transform_0, window_bounds = array<i64: 4, 128>}, {transform_indices = @transform_1, window_bounds = array<i64: 16, 128>}, {transform_indices = @transform_2, window_bounds = array<i64: 1, 128>}, {pipeline_mode = #tpu.pipeline_mode<synchronous>, transform_indices = @transform_3, window_bounds = array<i64: 128, 4>}, {pipeline_mode = #tpu.pipeline_mode<synchronous>, transform_indices = @transform_4, window_bounds = array<i64: 128, 16>}, {pipeline_mode = #tpu.pipeline_mode<synchronous>, transform_indices = @transform_5, window_bounds = array<i64: 128, 1>}, {pipeline_mode = #tpu.pipeline_mode<synchronous>, transform_indices = @transform_6, window_bounds = array<i64: 128, 1>}, {pipeline_mode = #tpu.pipeline_mode<synchronous>, transform_indices = @transform_7, window_bounds = array<i64: 128, 128>}, {pipeline_mode = #tpu.pipeline_mode<synchronous>, transform_indices = @transform_8, window_bounds = array<i64: 128, 1>}, {pipeline_mode = #tpu.pipeline_mode<synchronous>, transform_indices = @transform_9, window_bounds = array<i64: 128, 1>}, {pipeline_mode = #tpu.pipeline_mode<synchronous>, transform_indices = @transform_10, window_bounds = array<i64: 1, 1>}, {transform_indices = @transform_11, window_bounds = array<i64: 1, 128>}]} {
    %c0 = arith.constant 0 : index
    %c0_0 = arith.constant 0 : index
    %0 = vector.load %arg4[%c0, %c0_0] : memref<128x4xbf16, #tpu.memory_space<vmem>>, vector<128x4xbf16>
    %c0_1 = arith.constant 0 : index
    %c0_2 = arith.constant 0 : index
    %1 = vector.load %arg1[%c0_1, %c0_2] : memref<4x128xbf16, #tpu.memory_space<vmem>>, vector<4x128xbf16>
    %cst = arith.constant dense<0.000000e+00> : vector<128x128xf32>
    %2 = tpu.matmul %0, %1, %cst {dimension_numbers = #tpu.dot_dimension_numbers<[1], [0], [0], [1], [0, 0, 1, 1], [], []>} : vector<128x4xbf16>, vector<4x128xbf16>, vector<128x128xf32> -> vector<128x128xf32>
    %c0_3 = arith.constant 0 : index
    %c0_4 = arith.constant 0 : index
    %3 = vector.load %arg5[%c0_3, %c0_4] : memref<128x16xbf16, #tpu.memory_space<vmem>>, vector<128x16xbf16>
    %c0_5 = arith.constant 0 : index
    %c0_6 = arith.constant 0 : index
    %4 = vector.load %arg2[%c0_5, %c0_6] : memref<16x128xbf16, #tpu.memory_space<vmem>>, vector<16x128xbf16>
    %cst_7 = arith.constant dense<0.000000e+00> : vector<128x128xf32>
    %5 = tpu.matmul %3, %4, %cst_7 {dimension_numbers = #tpu.dot_dimension_numbers<[1], [0], [0], [1], [0, 0, 1, 1], [], []>} : vector<128x16xbf16>, vector<16x128xbf16>, vector<128x128xf32> -> vector<128x128xf32>
    %6 = arith.addf %2, %5 : vector<128x128xf32>
    %c0_8 = arith.constant 0 : index
    %c0_9 = arith.constant 0 : index
    %7 = vector.load %arg6[%c0_8, %c0_9] : memref<128x1xf32, #tpu.memory_space<vmem>>, vector<128x1xf32>
    %c0_10 = arith.constant 0 : index
    %c0_11 = arith.constant 0 : index
    %8 = vector.load %arg3[%c0_10, %c0_11] : memref<1x128xf32, #tpu.memory_space<vmem>>, vector<1x128xf32>
    %9 = vector.broadcast %7 : vector<128x1xf32> to vector<128x128xf32>
    %10 = vector.broadcast %8 : vector<1x128xf32> to vector<128x128xf32>
    %11 = arith.mulf %9, %10 : vector<128x128xf32>
    %12 = arith.addf %6, %11 : vector<128x128xf32>
    %c0_12 = arith.constant 0 : index
    %c0_13 = arith.constant 0 : index
    %13 = vector.load %arg7[%c0_12, %c0_13] : memref<128x1xf32, #tpu.memory_space<vmem>>, vector<128x1xf32>
    %14 = vector.broadcast %13 : vector<128x1xf32> to vector<128x128xf32>
    %15 = arith.addf %12, %14 : vector<128x128xf32>
    %16 = math.tanh %15 : vector<128x128xf32>
    %c0_14 = arith.constant 0 : index
    %c0_15 = arith.constant 0 : index
    %17 = vector.load %arg8[%c0_14, %c0_15] : memref<128x128xbf16, #tpu.memory_space<vmem>>, vector<128x128xbf16>
    %18 = arith.truncf %16 : vector<128x128xf32> to vector<128x128xbf16>
    %cst_16 = arith.constant dense<0.000000e+00> : vector<128x128xf32>
    %19 = tpu.matmul %17, %18, %cst_16 {dimension_numbers = #tpu.dot_dimension_numbers<[1], [0], [0], [1], [0, 0, 1, 1], [], []>} : vector<128x128xbf16>, vector<128x128xbf16>, vector<128x128xf32> -> vector<128x128xf32>
    %c0_17 = arith.constant 0 : index
    %c0_18 = arith.constant 0 : index
    %20 = vector.load %arg9[%c0_17, %c0_18] : memref<128x1xf32, #tpu.memory_space<vmem>>, vector<128x1xf32>
    %21 = vector.broadcast %20 : vector<128x1xf32> to vector<128x128xf32>
    %22 = arith.addf %19, %21 : vector<128x128xf32>
    %23 = math.tanh %22 : vector<128x128xf32>
    %c0_19 = arith.constant 0 : index
    %c0_20 = arith.constant 0 : index
    %24 = vector.load %arg10[%c0_19, %c0_20] : memref<128x1xf32, #tpu.memory_space<vmem>>, vector<128x1xf32>
    %25 = vector.broadcast %24 : vector<128x1xf32> to vector<128x128xf32>
    %26 = arith.mulf %25, %23 : vector<128x128xf32>
    %cst_21 = arith.constant dense<0.000000e+00> : vector<128xf32>
    %27 = vector.multi_reduction <add>, %26, %cst_21 [0] : vector<128x128xf32> to vector<128xf32>
    %28 = vector.shape_cast %27 : vector<128xf32> to vector<1x128xf32>
    %c0_22 = arith.constant 0 : index
    %c0_23 = arith.constant 0 : index
    %29 = vector.load %arg11[%c0_22, %c0_23] : memref<1x1xf32, #tpu.memory_space<vmem>>, vector<1x1xf32>
    %30 = vector.broadcast %29 : vector<1x1xf32> to vector<1x128xf32>
    %31 = arith.addf %28, %30 : vector<1x128xf32>
    %c0_24 = arith.constant 0 : index
    %c0_25 = arith.constant 0 : index
    %32 = vector.load %arg12[%c0_24, %c0_25] : memref<1x128xf32, #tpu.memory_space<vmem>>, vector<1x128xf32>
    tpu.vector_store %arg12[%c0_24, %c0_25], %31 {strides = array<i32>} : memref<1x128xf32, #tpu.memory_space<vmem>>, vector<1x128xf32>,
    return
  }
  func.func @transform_0(%arg0: i32) -> (i32, i32) {
    %c0_i32 = arith.constant 0 : i32
    %c0_i32_0 = arith.constant 0 : i32
    return %c0_i32, %arg0 : i32, i32
  }
  func.func @transform_1(%arg0: i32) -> (i32, i32) {
    %c0_i32 = arith.constant 0 : i32
    %c0_i32_0 = arith.constant 0 : i32
    return %c0_i32, %arg0 : i32, i32
  }
  func.func @transform_2(%arg0: i32) -> (i32, i32) {
    %c0_i32 = arith.constant 0 : i32
    %c0_i32_0 = arith.constant 0 : i32
    return %c0_i32, %arg0 : i32, i32
  }
  func.func @transform_3(%arg0: i32) -> (i32, i32) {
    %c0_i32 = arith.constant 0 : i32
    %c0_i32_0 = arith.constant 0 : i32
    %c0_i32_1 = arith.constant 0 : i32
    return %c0_i32, %c0_i32_0 : i32, i32
  }
  func.func @transform_4(%arg0: i32) -> (i32, i32) {
    %c0_i32 = arith.constant 0 : i32
    %c0_i32_0 = arith.constant 0 : i32
    %c0_i32_1 = arith.constant 0 : i32
    return %c0_i32, %c0_i32_0 : i32, i32
  }
  func.func @transform_5(%arg0: i32) -> (i32, i32) {
    %c0_i32 = arith.constant 0 : i32
    %c0_i32_0 = arith.constant 0 : i32
    %c0_i32_1 = arith.constant 0 : i32
    return %c0_i32, %c0_i32_0 : i32, i32
  }
  func.func @transform_6(%arg0: i32) -> (i32, i32) {
    %c0_i32 = arith.constant 0 : i32
    %c0_i32_0 = arith.constant 0 : i32
    %c0_i32_1 = arith.constant 0 : i32
    return %c0_i32, %c0_i32_0 : i32, i32
  }
  func.func @transform_7(%arg0: i32) -> (i32, i32) {
    %c0_i32 = arith.constant 0 : i32
    %c0_i32_0 = arith.constant 0 : i32
    %c0_i32_1 = arith.constant 0 : i32
    return %c0_i32, %c0_i32_0 : i32, i32
  }
  func.func @transform_8(%arg0: i32) -> (i32, i32) {
    %c0_i32 = arith.constant 0 : i32
    %c0_i32_0 = arith.constant 0 : i32
    %c0_i32_1 = arith.constant 0 : i32
    return %c0_i32, %c0_i32_0 : i32, i32
  }
  func.func @transform_9(%arg0: i32) -> (i32, i32) {
    %c0_i32 = arith.constant 0 : i32
    %c0_i32_0 = arith.constant 0 : i32
    %c0_i32_1 = arith.constant 0 : i32
    return %c0_i32, %c0_i32_0 : i32, i32
  }
  func.func @transform_10(%arg0: i32) -> (i32, i32) {
    %c0_i32 = arith.constant 0 : i32
    %c0_i32_0 = arith.constant 0 : i32
    %c0_i32_1 = arith.constant 0 : i32
    return %c0_i32, %c0_i32_0 : i32, i32
  }
  func.func @transform_11(%arg0: i32) -> (i32, i32) {
    %c0_i32 = arith.constant 0 : i32
    %c0_i32_0 = arith.constant 0 : i32
    return %c0_i32, %arg0 : i32, i32
  }
}

</mosaic_0001>

<llo_original>
// kernel: tpu_custom_call.1
$region0: #{tpu_custom_call.1}
  #allocation0 [shape = 'u32[]', space=smem, size = 0x4, offset = 0x4, fixed_abs, tag = 'smem constant byte address 0x4 - core index']
  #allocation1 [shape = 'u32[144,128]{1,0:T(1,128)}', space=vmem, size = 0x12000, scoped, tag = 'internal scratch']
  #allocation2 [shape = 'f32[1,1]{1,0:T(1,128)S(1)}', space=vmem, size = 0x200, scoped, tag = 'scoped memory for tpu_custom_call.1']
  %s0 = inlined_call_operand.vmem [shape: bf16[4,16], index: 0, kind: input, shape index: {}]
  %s1 = inlined_call_operand.vmem [shape: bf16[16,16], index: 1, kind: input, shape index: {}]
  %s2 = inlined_call_operand.vmem [shape: f32[1,16], index: 2, kind: input, shape index: {}]
  %s3 = inlined_call_operand.vmem [shape: bf16[128,4], index: 3, kind: input, shape index: {}]
  %s4 = inlined_call_operand.vmem [shape: bf16[128,16], index: 4, kind: input, shape index: {}]
  %s5 = inlined_call_operand.vmem [shape: f32[128,1], index: 5, kind: input, shape index: {}]
  %s6 = inlined_call_operand.vmem [shape: f32[128,1], index: 6, kind: input, shape index: {}]
  %s7 = inlined_call_operand.vmem [shape: bf16[128,128], index: 7, kind: input, shape index: {}]
  %s8 = inlined_call_operand.vmem [shape: f32[128,1], index: 8, kind: input, shape index: {}]
  %s9 = inlined_call_operand.vmem [shape: f32[128,1], index: 9, kind: input, shape index: {}]
  %s10 = inlined_call_operand.<no memory space> [shape: f32[1,1], index: 10, kind: input, shape index: {}]
  %s11 = inlined_call_operand.hbm [shape: f32[1,16], index: 11, kind: output, shape index: {}]
  %s12 = sld [smem:[#allocation0]]
  $region54: #{tpu_custom_call.1} parent=0
    _
  %s14 = ssub.s32 1, %s12
  %s15 = scalar_select 0, %s14, %s12
  %v16 = vstv %s10
  %17 = vst [vmem:[#allocation2] sm:$0x1] %v16
  $region1: #{tpu_custom_call.1} parent=0
    #allocation3 [shape = 'u8[512]{0}', space=vmem, size = 0x400, scoped, tag = 'output window, operand 0, single buffered']
    #allocation4 [shape = 's32[1]{0}', space=sflag, size = 0x4, scoped, tag = 'scoped memory for tpu_custom_call.1']
    %18 = vsyncpa [#allocation4], 0
    // Predicated region
    $region2: #{tpu_custom_call.1} parent=1 // pred_check
      _
    $region3: #{tpu_custom_call.1} parent=1 // pred_check_branch
      %20 = sbr.rel (0) target = $region5
    $region4: #{tpu_custom_call.1} parent=1 // pred_region
      _
    $region5: #{tpu_custom_call.1} parent=1 // pred_fallthru
      _
    // Predicated region
    $region6: #{tpu_custom_call.1} parent=1 // pred_check
      _
    $region7: #{tpu_custom_call.1} parent=1 // pred_check_branch
      %22 = sbr.rel (0) target = $region9
    $region8: #{tpu_custom_call.1} parent=1 // pred_region
      _
    $region9: #{tpu_custom_call.1} parent=1 // pred_fallthru
      _
    // Predicated region
    $region10: #{tpu_custom_call.1} parent=1 // pred_check
      _
    $region11: #{tpu_custom_call.1} parent=1 // pred_check_branch
      %24 = sbr.rel (0) target = $region13
    $region12: #{tpu_custom_call.1} parent=1 // pred_region
      _
    $region13: #{tpu_custom_call.1} parent=1 // pred_fallthru
      _
    // Predicated region
    $region14: #{tpu_custom_call.1} parent=1 // pred_check
      _
    $region15: #{tpu_custom_call.1} parent=1 // pred_check_branch
      %26 = sbr.rel (0) target = $region17
    $region16: #{tpu_custom_call.1} parent=1 // pred_region
      _
    $region17: #{tpu_custom_call.1} parent=1 // pred_fallthru
      _
    // Predicated region
    $region18: #{tpu_custom_call.1} parent=1 // pred_check
      _
    $region19: #{tpu_custom_call.1} parent=1 // pred_check_branch
      %28 = sbr.rel (0) target = $region21
    $region20: #{tpu_custom_call.1} parent=1 // pred_region
      _
    $region21: #{tpu_custom_call.1} parent=1 // pred_fallthru
      _
    // Predicated region
    $region22: #{tpu_custom_call.1} parent=1 // pred_check
      _
    $region23: #{tpu_custom_call.1} parent=1 // pred_check_branch
      %30 = sbr.rel (0) target = $region25
    $region24: #{tpu_custom_call.1} parent=1 // pred_region
      _
    $region25: #{tpu_custom_call.1} parent=1 // pred_fallthru
      _
    // Predicated region
    $region26: #{tpu_custom_call.1} parent=1 // pred_check
      _
    $region27: #{tpu_custom_call.1} parent=1 // pred_check_branch
      %32 = sbr.rel (0) target = $region29
    $region28: #{tpu_custom_call.1} parent=1 // pred_region
      _
    $region29: #{tpu_custom_call.1} parent=1 // pred_fallthru
      _
    // Predicated region
    $region30: #{tpu_custom_call.1} parent=1 // pred_check
      _
    $region31: #{tpu_custom_call.1} parent=1 // pred_check_branch
      %34 = sbr.rel (0) target = $region33
    $region32: #{tpu_custom_call.1} parent=1 // pred_region
      _
    $region33: #{tpu_custom_call.1} parent=1 // pred_fallthru
      _
    // Predicated region
    $region34: #{tpu_custom_call.1} parent=1 // pred_check
      _
    $region35: #{tpu_custom_call.1} parent=1 // pred_check_branch
      %36 = sbr.rel (0) target = $region37
    $region36: #{tpu_custom_call.1} parent=1 // pred_region
      _
    $region37: #{tpu_custom_call.1} parent=1 // pred_fallthru
      _
    // Predicated region
    $region38: #{tpu_custom_call.1} parent=1 // pred_check
      _
    $region39: #{tpu_custom_call.1} parent=1 // pred_check_branch
      %38 = sbr.rel (0) target = $region41
    $region40: #{tpu_custom_call.1} parent=1 // pred_region
      _
    $region41: #{tpu_custom_call.1} parent=1 // pred_fallthru
      _
    // Predicated region
    $region42: #{tpu_custom_call.1} parent=1 // pred_check
      _
    $region43: #{tpu_custom_call.1} parent=1 // pred_check_branch
      %40 = sbr.rel (0) target = $region45
    $region44: #{tpu_custom_call.1} parent=1 // pred_region
      _
    $region45: #{tpu_custom_call.1} parent=1 // pred_fallthru
      _
    %v42 = vld [vmem:[%s3] sm:$0xf]
    %v43 = vld [vmem:[%s3 + $0x4] sm:$0xf]
    %v44 = vld [vmem:[%s3 + $0x8] sm:$0xf]
    %v45 = vld [vmem:[%s3 + $0xc] sm:$0xf]
    %v46 = vld [vmem:[%s3 + $0x10] sm:$0xf]
    %v47 = vld [vmem:[%s3 + $0x14] sm:$0xf]
    %v48 = vld [vmem:[%s3 + $0x18] sm:$0xf]
    %v49 = vld [vmem:[%s3 + $0x1c] sm:$0xf]
    %v50 = vld [vmem:[%s3 + $0x20] sm:$0xf]
    %v51 = vld [vmem:[%s3 + $0x24] sm:$0xf]
    %v52 = vld [vmem:[%s3 + $0x28] sm:$0xf]
    %v53 = vld [vmem:[%s3 + $0x2c] sm:$0xf]
    %v54 = vld [vmem:[%s3 + $0x30] sm:$0xf]
    %v55 = vld [vmem:[%s3 + $0x34] sm:$0xf]
    %v56 = vld [vmem:[%s3 + $0x38] sm:$0xf]
    %v57 = vld [vmem:[%s3 + $0x3c] sm:$0xf]
    %v58 = vld [vmem:[%s0] sm:$0x3]
    %v59 = vld [vmem:[%s4] sm:$0xf]
    %v60 = vld [vmem:[%s4 + $0x4] sm:$0xf]
    %v61 = vld [vmem:[%s4 + $0x8] sm:$0xf]
    %v62 = vld [vmem:[%s4 + $0xc] sm:$0xf]
    %v63 = vld [vmem:[%s4 + $0x10] sm:$0xf]
    %v64 = vld [vmem:[%s4 + $0x14] sm:$0xf]
    %v65 = vld [vmem:[%s4 + $0x18] sm:$0xf]
    %v66 = vld [vmem:[%s4 + $0x1c] sm:$0xf]
    %v67 = vld [vmem:[%s4 + $0x20] sm:$0xf]
    %v68 = vld [vmem:[%s4 + $0x24] sm:$0xf]
    %v69 = vld [vmem:[%s4 + $0x28] sm:$0xf]
    %v70 = vld [vmem:[%s4 + $0x2c] sm:$0xf]
    %v71 = vld [vmem:[%s4 + $0x30] sm:$0xf]
    %v72 = vld [vmem:[%s4 + $0x34] sm:$0xf]
    %v73 = vld [vmem:[%s4 + $0x38] sm:$0xf]
    %v74 = vld [vmem:[%s4 + $0x3c] sm:$0xf]
    %v75 = vld [vmem:[%s1] sm:$0xf]
    %v76 = vld [vmem:[%s1 + $0x4] sm:$0xf]
    %v93 = vunpack.c.l.b16 %v59
    %v94 = vunpack.c.l.b16 %v60
    %v95 = vunpack.c.l.b16 %v61
    %v96 = vunpack.c.l.b16 %v62
    %v97 = vunpack.c.l.b16 %v63
    %v98 = vunpack.c.l.b16 %v64
    %v99 = vunpack.c.l.b16 %v65
    %v100 = vunpack.c.l.b16 %v66
    %v101 = vunpack.c.l.b16 %v67
    %v102 = vunpack.c.l.b16 %v68
    %v103 = vunpack.c.l.b16 %v69
    %v104 = vunpack.c.l.b16 %v70
    %v105 = vunpack.c.l.b16 %v71
    %v106 = vunpack.c.l.b16 %v72
    %v107 = vunpack.c.l.b16 %v73
    %v108 = vunpack.c.l.b16 %v74
    %v109 = vpack.c.b16 %v94, %v93
    %v110 = vpack.c.b16 %v96, %v95
    %v111 = vpack.c.b16 %v98, %v97
    %v112 = vpack.c.b16 %v100, %v99
    %v113 = vpack.c.b16 %v102, %v101
    %v114 = vpack.c.b16 %v104, %v103
    %v115 = vpack.c.b16 %v106, %v105
    %v116 = vpack.c.b16 %v108, %v107
    %v119 = vunpack.c.l.b16 %v75
    %v120 = vunpack.c.l.b16 %v76
    %v121 = vpack.c.b16 %v120, %v119
    %vm123 = vcmask 130048
    %v125 = vsel %vm123, %v109, 0
    %v128 = vsel %vm123, %v110, 0
    %v131 = vsel %vm123, %v111, 0
    %v134 = vsel %vm123, %v112, 0
    %v137 = vsel %vm123, %v113, 0
    %v140 = vsel %vm123, %v114, 0
    %v143 = vsel %vm123, %v115, 0
    %v146 = vsel %vm123, %v116, 0
    %148 = vmatprep.subr.bf16.mxu0 0
    %149 = vmatpush1.bf16.msra.mxu0 0
    %150 = vmatprep.subr.bf16.mxu0 0
    %151 = vmatpush1.bf16.msra.mxu0 0
    %152 = vmatprep.subr.bf16.mxu0 0
    %153 = vmatpush1.bf16.msra.mxu0 0
    %154 = vmatprep.subr.bf16.mxu0 0
    %155 = vmatpush1.bf16.msra.mxu0 0
    %156 = vmatprep.subr.bf16.mxu0 0
    %157 = vmatpush1.bf16.msra.mxu0 0
    %158 = vmatprep.subr.bf16.mxu0 0
    %159 = vmatpush1.bf16.msra.mxu0 0
    %160 = vmatprep.subr.bf16.mxu0 0
    %161 = vmatpush1.bf16.msra.mxu0 0
    %162 = vmatprep.subr.bf16.mxu0 0
    %163 = vmatpush1.bf16.msra.mxu0 %v121
    %164 = vmatprep.subr.bf16.mxu0 0
    %165 = vmatpush2.bf16.msra.mxu0 0
    %166 = vmatprep.subr.bf16.mxu0 0
    %167 = vmatpush2.bf16.msra.mxu0 0
    %168 = vmatprep.subr.bf16.mxu0 0
    %169 = vmatpush2.bf16.msra.mxu0 0
    %170 = vmatprep.subr.bf16.mxu0 0
    %171 = vmatpush2.bf16.msra.mxu0 0
    %172 = vmatprep.subr.bf16.mxu0 0
    %173 = vmatpush2.bf16.msra.mxu0 0
    %174 = vmatprep.subr.bf16.mxu0 0
    %175 = vmatpush2.bf16.msra.mxu0 0
    %176 = vmatprep.subr.bf16.mxu0 0
    %177 = vmatpush2.bf16.msra.mxu0 0
    %178 = vmatprep.subr.bf16.mxu0 0
    %179 = vmatpush2.bf16.msra.mxu0 0
    %180 = vmatprep.mubr.bf16.mxu0 0
    %181 = vmatmul.mubr.bf16.gmra.mxu0 %v125
    %v182 = vpop.f32.mrf.mxu0
    %v183 = vadd.f32 0.0, %v182
    %v184 = vpop.f32.mrf.mxu0
    %v185 = vpop.f32.mrf.mxu0
    %v186 = vadd.f32 0.0, %v185
    %v187 = vpop.f32.mrf.mxu0
    %188 = vmatprep.mubr.bf16.mxu0 0
    %189 = vmatmul.mubr.bf16.gmra.mxu0 %v128
    %v190 = vpop.f32.mrf.mxu0
    %v191 = vadd.f32 0.0, %v190
    %v192 = vpop.f32.mrf.mxu0
    %v193 = vpop.f32.mrf.mxu0
    %v194 = vadd.f32 0.0, %v193
    %v195 = vpop.f32.mrf.mxu0
    %196 = vmatprep.mubr.bf16.mxu0 0
    %197 = vmatmul.mubr.bf16.gmra.mxu0 %v131
    %v198 = vpop.f32.mrf.mxu0
    %v199 = vadd.f32 0.0, %v198
    %v200 = vpop.f32.mrf.mxu0
    %v201 = vpop.f32.mrf.mxu0
    %v202 = vadd.f32 0.0, %v201
    %v203 = vpop.f32.mrf.mxu0
    %204 = vmatprep.mubr.bf16.mxu0 0
    %205 = vmatmul.mubr.bf16.gmra.mxu0 %v134
    %v206 = vpop.f32.mrf.mxu0
    %v207 = vadd.f32 0.0, %v206
    %v208 = vpop.f32.mrf.mxu0
    %v209 = vpop.f32.mrf.mxu0
    %v210 = vadd.f32 0.0, %v209
    %v211 = vpop.f32.mrf.mxu0
    %212 = vmatprep.mubr.bf16.mxu0 0
    %213 = vmatmul.mubr.bf16.gmra.mxu0 %v137
    %v214 = vpop.f32.mrf.mxu0
    %v215 = vadd.f32 0.0, %v214
    %v216 = vpop.f32.mrf.mxu0
    %v217 = vpop.f32.mrf.mxu0
    %v218 = vadd.f32 0.0, %v217
    %v219 = vpop.f32.mrf.mxu0
    %220 = vmatprep.mubr.bf16.mxu0 0
    %221 = vmatmul.mubr.bf16.gmra.mxu0 %v140
    %v222 = vpop.f32.mrf.mxu0
    %v223 = vadd.f32 0.0, %v222
    %v224 = vpop.f32.mrf.mxu0
    %v225 = vpop.f32.mrf.mxu0
    %v226 = vadd.f32 0.0, %v225
    %v227 = vpop.f32.mrf.mxu0
    %228 = vmatprep.mubr.bf16.mxu0 0
    %229 = vmatmul.mubr.bf16.gmra.mxu0 %v143
    %v230 = vpop.f32.mrf.mxu0
    %v231 = vadd.f32 0.0, %v230
    %v232 = vpop.f32.mrf.mxu0
    %v233 = vpop.f32.mrf.mxu0
    %v234 = vadd.f32 0.0, %v233
    %v235 = vpop.f32.mrf.mxu0
    %236 = vmatprep.mubr.bf16.mxu0 0
    %237 = vmatmul.mubr.bf16.gmra.mxu0 %v146
    %v238 = vpop.f32.mrf.mxu0
    %v239 = vadd.f32 0.0, %v238
    %v240 = vpop.f32.mrf.mxu0
    %v241 = vpop.f32.mrf.mxu0
    %v242 = vadd.f32 0.0, %v241
    %v243 = vpop.f32.mrf.mxu0
    %244 = vdwg.mxu0
    %v261 = vunpack.c.l.b16 %v42
    %v262 = vunpack.c.l.b16 %v43
    %v263 = vunpack.c.l.b16 %v44
    %v264 = vunpack.c.l.b16 %v45
    %v265 = vunpack.c.l.b16 %v46
    %v266 = vunpack.c.l.b16 %v47
    %v267 = vunpack.c.l.b16 %v48
    %v268 = vunpack.c.l.b16 %v49
    %v269 = vunpack.c.l.b16 %v50
    %v270 = vunpack.c.l.b16 %v51
    %v271 = vunpack.c.l.b16 %v52
    %v272 = vunpack.c.l.b16 %v53
    %v273 = vunpack.c.l.b16 %v54
    %v274 = vunpack.c.l.b16 %v55
    %v275 = vunpack.c.l.b16 %v56
    %v276 = vunpack.c.l.b16 %v57
    %v277 = vpack.c.b16 %v262, %v261
    %v278 = vpack.c.b16 %v264, %v263
    %v279 = vpack.c.b16 %v266, %v265
    %v280 = vpack.c.b16 %v268, %v267
    %v281 = vpack.c.b16 %v270, %v269
    %v282 = vpack.c.b16 %v272, %v271
    %v283 = vpack.c.b16 %v274, %v273
    %v284 = vpack.c.b16 %v276, %v275
    %vm285 = vcmask 31744
    %v287 = vsel %vm285, %v277, 0
    %v290 = vsel %vm285, %v278, 0
    %v293 = vsel %vm285, %v279, 0
    %v296 = vsel %vm285, %v280, 0
    %v299 = vsel %vm285, %v281, 0
    %v302 = vsel %vm285, %v282, 0
    %v305 = vsel %vm285, %v283, 0
    %v308 = vsel %vm285, %v284, 0
    %vm310 = vcmask 1041408
    %v312 = vsel %vm310, %v58, 0
    %314 = vmatprep.subr.bf16.mxu0 0
    %315 = vmatpush1.bf16.msra.mxu0 0
    %316 = vmatprep.subr.bf16.mxu0 0
    %317 = vmatpush1.bf16.msra.mxu0 0
    %318 = vmatprep.subr.bf16.mxu0 0
    %319 = vmatpush1.bf16.msra.mxu0 0
    %320 = vmatprep.subr.bf16.mxu0 0
    %321 = vmatpush1.bf16.msra.mxu0 0
    %322 = vmatprep.subr.bf16.mxu0 0
    %323 = vmatpush1.bf16.msra.mxu0 0
    %324 = vmatprep.subr.bf16.mxu0 0
    %325 = vmatpush1.bf16.msra.mxu0 0
    %326 = vmatprep.subr.bf16.mxu0 0
    %327 = vmatpush1.bf16.msra.mxu0 0
    %328 = vmatprep.subr.bf16.mxu0 0
    %329 = vmatpush1.bf16.msra.mxu0 %v312
    %330 = vmatprep.subr.bf16.mxu0 0
    %331 = vmatpush2.bf16.msra.mxu0 0
    %332 = vmatprep.subr.bf16.mxu0 0
    %333 = vmatpush2.bf16.msra.mxu0 0
    %334 = vmatprep.subr.bf16.mxu0 0
    %335 = vmatpush2.bf16.msra.mxu0 0
    %336 = vmatprep.subr.bf16.mxu0 0
    %337 = vmatpush2.bf16.msra.mxu0 0
    %338 = vmatprep.subr.bf16.mxu0 0
    %339 = vmatpush2.bf16.msra.mxu0 0
    %340 = vmatprep.subr.bf16.mxu0 0
    %341 = vmatpush2.bf16.msra.mxu0 0
    %342 = vmatprep.subr.bf16.mxu0 0
    %343 = vmatpush2.bf16.msra.mxu0 0
    %344 = vmatprep.subr.bf16.mxu0 0
    %345 = vmatpush2.bf16.msra.mxu0 0
    %346 = vmatprep.mubr.bf16.mxu0 0
    %347 = vmatmul.mubr.bf16.gmra.mxu0 %v287
    %v348 = vpop.f32.mrf.mxu0
    %v349 = vadd.f32 %v183, %v348
    %v350 = vpop.f32.mrf.mxu0
    %v351 = vpop.f32.mrf.mxu0
    %v352 = vadd.f32 %v186, %v351
    %v353 = vpop.f32.mrf.mxu0
    %354 = vmatprep.mubr.bf16.mxu0 0
    %355 = vmatmul.mubr.bf16.gmra.mxu0 %v290
    %v356 = vpop.f32.mrf.mxu0
    %v357 = vadd.f32 %v191, %v356
    %v358 = vpop.f32.mrf.mxu0
    %v359 = vpop.f32.mrf.mxu0
    %v360 = vadd.f32 %v194, %v359
    %v361 = vpop.f32.mrf.mxu0
    %362 = vmatprep.mubr.bf16.mxu0 0
    %363 = vmatmul.mubr.bf16.gmra.mxu0 %v293
    %v364 = vpop.f32.mrf.mxu0
    %v365 = vadd.f32 %v199, %v364
    %v366 = vpop.f32.mrf.mxu0
    %v367 = vpop.f32.mrf.mxu0
    %v368 = vadd.f32 %v202, %v367
    %v369 = vpop.f32.mrf.mxu0
    %370 = vmatprep.mubr.bf16.mxu0 0
    %371 = vmatmul.mubr.bf16.gmra.mxu0 %v296
    %v372 = vpop.f32.mrf.mxu0
    %v373 = vadd.f32 %v207, %v372
    %v374 = vpop.f32.mrf.mxu0
    %v375 = vpop.f32.mrf.mxu0
    %v376 = vadd.f32 %v210, %v375
    %v377 = vpop.f32.mrf.mxu0
    %378 = vmatprep.mubr.bf16.mxu0 0
    %379 = vmatmul.mubr.bf16.gmra.mxu0 %v299
    %v380 = vpop.f32.mrf.mxu0
    %v381 = vadd.f32 %v215, %v380
    %v382 = vpop.f32.mrf.mxu0
    %v383 = vpop.f32.mrf.mxu0
    %v384 = vadd.f32 %v218, %v383
    %v385 = vpop.f32.mrf.mxu0
    %386 = vmatprep.mubr.bf16.mxu0 0
    %387 = vmatmul.mubr.bf16.gmra.mxu0 %v302
    %v388 = vpop.f32.mrf.mxu0
    %v389 = vadd.f32 %v223, %v388
    %v390 = vpop.f32.mrf.mxu0
    %v391 = vpop.f32.mrf.mxu0
    %v392 = vadd.f32 %v226, %v391
    %v393 = vpop.f32.mrf.mxu0
    %394 = vmatprep.mubr.bf16.mxu0 0
    %395 = vmatmul.mubr.bf16.gmra.mxu0 %v305
    %v396 = vpop.f32.mrf.mxu0
    %v397 = vadd.f32 %v231, %v396
    %v398 = vpop.f32.mrf.mxu0
    %v399 = vpop.f32.mrf.mxu0
    %v400 = vadd.f32 %v234, %v399
    %v401 = vpop.f32.mrf.mxu0
    %402 = vmatprep.mubr.bf16.mxu0 0
    %403 = vmatmul.mubr.bf16.gmra.mxu0 %v308
    %v404 = vpop.f32.mrf.mxu0
    %v405 = vadd.f32 %v239, %v404
    %v406 = vpop.f32.mrf.mxu0
    %v407 = vpop.f32.mrf.mxu0
    %v408 = vadd.f32 %v242, %v407
    %v409 = vpop.f32.mrf.mxu0
    %410 = vdwg.mxu0
    %v411 = vld [vmem:[%s5] sm:$0xff]
    %v412 = vld [vmem:[%s5 + $0x8] sm:$0xff]
    %v413 = vld [vmem:[%s5 + $0x10] sm:$0xff]
    %v414 = vld [vmem:[%s5 + $0x18] sm:$0xff]
    %v415 = vld [vmem:[%s5 + $0x20] sm:$0xff]
    %v416 = vld [vmem:[%s5 + $0x28] sm:$0xff]
    %v417 = vld [vmem:[%s5 + $0x30] sm:$0xff]
    %v418 = vld [vmem:[%s5 + $0x38] sm:$0xff]
    %v419 = vld [vmem:[%s5 + $0x40] sm:$0xff]
    %v420 = vld [vmem:[%s5 + $0x48] sm:$0xff]
    %v421 = vld [vmem:[%s5 + $0x50] sm:$0xff]
    %v422 = vld [vmem:[%s5 + $0x58] sm:$0xff]
    %v423 = vld [vmem:[%s5 + $0x60] sm:$0xff]
    %v424 = vld [vmem:[%s5 + $0x68] sm:$0xff]
    %v425 = vld [vmem:[%s5 + $0x70] sm:$0xff]
    %v426 = vld [vmem:[%s5 + $0x78] sm:$0xff]
    %v427 = vld [vmem:[%s2] sm:$0x1]
    %429 = vset.pattern.permute.xlu0 0
    %430 = vperm.xlu0 %429, %v411
    %v431 = vpop.permute.xlu0 %430
    %434 = vset.pattern.permute.xlu0 0
    %435 = vperm.xlu0 %434, %v412
    %v436 = vpop.permute.xlu0 %435
    %439 = vset.pattern.permute.xlu0 0
    %440 = vperm.xlu0 %439, %v413
    %v441 = vpop.permute.xlu0 %440
    %444 = vset.pattern.permute.xlu0 0
    %445 = vperm.xlu0 %444, %v414
    %v446 = vpop.permute.xlu0 %445
    %449 = vset.pattern.permute.xlu0 0
    %450 = vperm.xlu0 %449, %v415
    %v451 = vpop.permute.xlu0 %450
    %454 = vset.pattern.permute.xlu0 0
    %455 = vperm.xlu0 %454, %v416
    %v456 = vpop.permute.xlu0 %455
    %459 = vset.pattern.permute.xlu0 0
    %460 = vperm.xlu0 %459, %v417
    %v461 = vpop.permute.xlu0 %460
    %464 = vset.pattern.permute.xlu0 0
    %465 = vperm.xlu0 %464, %v418
    %v466 = vpop.permute.xlu0 %465
    %469 = vset.pattern.permute.xlu0 0
    %470 = vperm.xlu0 %469, %v419
    %v471 = vpop.permute.xlu0 %470
    %474 = vset.pattern.permute.xlu0 0
    %475 = vperm.xlu0 %474, %v420
    %v476 = vpop.permute.xlu0 %475
    %479 = vset.pattern.permute.xlu0 0
    %480 = vperm.xlu0 %479, %v421
    %v481 = vpop.permute.xlu0 %480
    %484 = vset.pattern.permute.xlu0 0
    %485 = vperm.xlu0 %484, %v422
    %v486 = vpop.permute.xlu0 %485
    %489 = vset.pattern.permute.xlu0 0
    %490 = vperm.xlu0 %489, %v423
    %v491 = vpop.permute.xlu0 %490
    %494 = vset.pattern.permute.xlu0 0
    %495 = vperm.xlu0 %494, %v424
    %v496 = vpop.permute.xlu0 %495
    %499 = vset.pattern.permute.xlu0 0
    %500 = vperm.xlu0 %499, %v425
    %v501 = vpop.permute.xlu0 %500
    %504 = vset.pattern.permute.xlu0 0
    %505 = vperm.xlu0 %504, %v426
    %v506 = vpop.permute.xlu0 %505
    %v509 = vlaneseq
    %v510 = vshrl.u32 %v509, 7
    %v511 = vsub.s32 0, %v510
    %v512 = vrot.slane %v427, %v511
    %v514 = vmul.f32 %v431, %v512
    %v515 = vmul.f32 %v436, %v512
    %v516 = vmul.f32 %v441, %v512
    %v517 = vmul.f32 %v446, %v512
    %v518 = vmul.f32 %v451, %v512
    %v519 = vmul.f32 %v456, %v512
    %v520 = vmul.f32 %v461, %v512
    %v521 = vmul.f32 %v466, %v512
    %v522 = vmul.f32 %v471, %v512
    %v523 = vmul.f32 %v476, %v512
    %v524 = vmul.f32 %v481, %v512
    %v525 = vmul.f32 %v486, %v512
    %v526 = vmul.f32 %v491, %v512
    %v527 = vmul.f32 %v496, %v512
    %v528 = vmul.f32 %v501, %v512
    %v529 = vmul.f32 %v506, %v512
    %v530 = vadd.f32 %v349, %v514
    %v531 = vadd.f32 %v352, %v515
    %v532 = vadd.f32 %v357, %v516
    %v533 = vadd.f32 %v360, %v517
    %v534 = vadd.f32 %v365, %v518
    %v535 = vadd.f32 %v368, %v519
    %v536 = vadd.f32 %v373, %v520
    %v537 = vadd.f32 %v376, %v521
    %v538 = vadd.f32 %v381, %v522
    %v539 = vadd.f32 %v384, %v523
    %v540 = vadd.f32 %v389, %v524
    %v541 = vadd.f32 %v392, %v525
    %v542 = vadd.f32 %v397, %v526
    %v543 = vadd.f32 %v400, %v527
    %v544 = vadd.f32 %v405, %v528
    %v545 = vadd.f32 %v408, %v529
    %v546 = vld [vmem:[%s6] sm:$0xff]
    %v547 = vld [vmem:[%s6 + $0x8] sm:$0xff]
    %v548 = vld [vmem:[%s6 + $0x10] sm:$0xff]
    %v549 = vld [vmem:[%s6 + $0x18] sm:$0xff]
    %v550 = vld [vmem:[%s6 + $0x20] sm:$0xff]
    %v551 = vld [vmem:[%s6 + $0x28] sm:$0xff]
    %v552 = vld [vmem:[%s6 + $0x30] sm:$0xff]
    %v553 = vld [vmem:[%s6 + $0x38] sm:$0xff]
    %v554 = vld [vmem:[%s6 + $0x40] sm:$0xff]
    %v555 = vld [vmem:[%s6 + $0x48] sm:$0xff]
    %v556 = vld [vmem:[%s6 + $0x50] sm:$0xff]
    %v557 = vld [vmem:[%s6 + $0x58] sm:$0xff]
    %v558 = vld [vmem:[%s6 + $0x60] sm:$0xff]
    %v559 = vld [vmem:[%s6 + $0x68] sm:$0xff]
    %v560 = vld [vmem:[%s6 + $0x70] sm:$0xff]
    %v561 = vld [vmem:[%s6 + $0x78] sm:$0xff]
    %563 = vset.pattern.permute.xlu0 0
    %564 = vperm.xlu0 %563, %v546
    %v565 = vpop.permute.xlu0 %564
    %568 = vset.pattern.permute.xlu0 0
    %569 = vperm.xlu0 %568, %v547
    %v570 = vpop.permute.xlu0 %569
    %573 = vset.pattern.permute.xlu0 0
    %574 = vperm.xlu0 %573, %v548
    %v575 = vpop.permute.xlu0 %574
    %578 = vset.pattern.permute.xlu0 0
    %579 = vperm.xlu0 %578, %v549
    %v580 = vpop.permute.xlu0 %579
    %583 = vset.pattern.permute.xlu0 0
    %584 = vperm.xlu0 %583, %v550
    %v585 = vpop.permute.xlu0 %584
    %588 = vset.pattern.permute.xlu0 0
    %589 = vperm.xlu0 %588, %v551
    %v590 = vpop.permute.xlu0 %589
    %593 = vset.pattern.permute.xlu0 0
    %594 = vperm.xlu0 %593, %v552
    %v595 = vpop.permute.xlu0 %594
    %598 = vset.pattern.permute.xlu0 0
    %599 = vperm.xlu0 %598, %v553
    %v600 = vpop.permute.xlu0 %599
    %603 = vset.pattern.permute.xlu0 0
    %604 = vperm.xlu0 %603, %v554
    %v605 = vpop.permute.xlu0 %604
    %608 = vset.pattern.permute.xlu0 0
    %609 = vperm.xlu0 %608, %v555
    %v610 = vpop.permute.xlu0 %609
    %613 = vset.pattern.permute.xlu0 0
    %614 = vperm.xlu0 %613, %v556
    %v615 = vpop.permute.xlu0 %614
    %618 = vset.pattern.permute.xlu0 0
    %619 = vperm.xlu0 %618, %v557
    %v620 = vpop.permute.xlu0 %619
    %623 = vset.pattern.permute.xlu0 0
    %624 = vperm.xlu0 %623, %v558
    %v625 = vpop.permute.xlu0 %624
    %628 = vset.pattern.permute.xlu0 0
    %629 = vperm.xlu0 %628, %v559
    %v630 = vpop.permute.xlu0 %629
    %633 = vset.pattern.permute.xlu0 0
    %634 = vperm.xlu0 %633, %v560
    %v635 = vpop.permute.xlu0 %634
    %638 = vset.pattern.permute.xlu0 0
    %639 = vperm.xlu0 %638, %v561
    %v640 = vpop.permute.xlu0 %639
    %v642 = vadd.f32 %v530, %v565
    %v643 = vadd.f32 %v531, %v570
    %v644 = vadd.f32 %v532, %v575
    %v645 = vadd.f32 %v533, %v580
    %v646 = vadd.f32 %v534, %v585
    %v647 = vadd.f32 %v535, %v590
    %v648 = vadd.f32 %v536, %v595
    %v649 = vadd.f32 %v537, %v600
    %v650 = vadd.f32 %v538, %v605
    %v651 = vadd.f32 %v539, %v610
    %v652 = vadd.f32 %v540, %v615
    %v653 = vadd.f32 %v541, %v620
    %v654 = vadd.f32 %v542, %v625
    %v655 = vadd.f32 %v543, %v630
    %v656 = vadd.f32 %v544, %v635
    %v657 = vadd.f32 %v545, %v640
    %v658 = vtanh.pop %v642
    %v659 = vtanh.pop %v643
    %v660 = vtanh.pop %v644
    %v661 = vtanh.pop %v645
    %v662 = vtanh.pop %v646
    %v663 = vtanh.pop %v647
    %v664 = vtanh.pop %v648
    %v665 = vtanh.pop %v649
    %v666 = vtanh.pop %v650
    %v667 = vtanh.pop %v651
    %v668 = vtanh.pop %v652
    %v669 = vtanh.pop %v653
    %v670 = vtanh.pop %v654
    %v671 = vtanh.pop %v655
    %v672 = vtanh.pop %v656
    %v673 = vtanh.pop %v657
    %v674 = vld [vmem:[%s7] sm:$0xf]
    %v675 = vld [vmem:[%s7 + $0x4] sm:$0xf]
    %v676 = vld [vmem:[%s7 + $0x8] sm:$0xf]
    %v677 = vld [vmem:[%s7 + $0xc] sm:$0xf]
    %v678 = vld [vmem:[%s7 + $0x10] sm:$0xf]
    %v679 = vld [vmem:[%s7 + $0x14] sm:$0xf]
    %v680 = vld [vmem:[%s7 + $0x18] sm:$0xf]
    %v681 = vld [vmem:[%s7 + $0x1c] sm:$0xf]
    %v682 = vld [vmem:[%s7 + $0x20] sm:$0xf]
    %v683 = vld [vmem:[%s7 + $0x24] sm:$0xf]
    %v684 = vld [vmem:[%s7 + $0x28] sm:$0xf]
    %v685 = vld [vmem:[%s7 + $0x2c] sm:$0xf]
    %v686 = vld [vmem:[%s7 + $0x30] sm:$0xf]
    %v687 = vld [vmem:[%s7 + $0x34] sm:$0xf]
    %v688 = vld [vmem:[%s7 + $0x38] sm:$0xf]
    %v689 = vld [vmem:[%s7 + $0x3c] sm:$0xf]
    %v690 = vpack.c.bf16 %v659, %v658
    %v691 = vpack.c.bf16 %v661, %v660
    %v692 = vpack.c.bf16 %v663, %v662
    %v693 = vpack.c.bf16 %v665, %v664
    %v694 = vpack.c.bf16 %v667, %v666
    %v695 = vpack.c.bf16 %v669, %v668
    %v696 = vpack.c.bf16 %v671, %v670
    %v697 = vpack.c.bf16 %v673, %v672
    %v698 = vld [vmem:[%s8] sm:$0xff]
    %v699 = vld [vmem:[%s8 + $0x8] sm:$0xff]
    %v700 = vld [vmem:[%s8 + $0x10] sm:$0xff]
    %v701 = vld [vmem:[%s8 + $0x18] sm:$0xff]
    %v702 = vld [vmem:[%s8 + $0x20] sm:$0xff]
    %v703 = vld [vmem:[%s8 + $0x28] sm:$0xff]
    %v704 = vld [vmem:[%s8 + $0x30] sm:$0xff]
    %v705 = vld [vmem:[%s8 + $0x38] sm:$0xff]
    %v706 = vld [vmem:[%s8 + $0x40] sm:$0xff]
    %v707 = vld [vmem:[%s8 + $0x48] sm:$0xff]
    %v708 = vld [vmem:[%s8 + $0x50] sm:$0xff]
    %v709 = vld [vmem:[%s8 + $0x58] sm:$0xff]
    %v710 = vld [vmem:[%s8 + $0x60] sm:$0xff]
    %v711 = vld [vmem:[%s8 + $0x68] sm:$0xff]
    %v712 = vld [vmem:[%s8 + $0x70] sm:$0xff]
    %v713 = vld [vmem:[%s8 + $0x78] sm:$0xff]
    %715 = vset.pattern.permute.xlu0 0
    %716 = vperm.xlu0 %715, %v698
    %v717 = vpop.permute.xlu0 %716
    %720 = vset.pattern.permute.xlu0 0
    %721 = vperm.xlu0 %720, %v699
    %v722 = vpop.permute.xlu0 %721
    %725 = vset.pattern.permute.xlu0 0
    %726 = vperm.xlu0 %725, %v700
    %v727 = vpop.permute.xlu0 %726
    %730 = vset.pattern.permute.xlu0 0
    %731 = vperm.xlu0 %730, %v701
    %v732 = vpop.permute.xlu0 %731
    %735 = vset.pattern.permute.xlu0 0
    %736 = vperm.xlu0 %735, %v702
    %v737 = vpop.permute.xlu0 %736
    %740 = vset.pattern.permute.xlu0 0
    %741 = vperm.xlu0 %740, %v703
    %v742 = vpop.permute.xlu0 %741
    %745 = vset.pattern.permute.xlu0 0
    %746 = vperm.xlu0 %745, %v704
    %v747 = vpop.permute.xlu0 %746
    %750 = vset.pattern.permute.xlu0 0
    %751 = vperm.xlu0 %750, %v705
    %v752 = vpop.permute.xlu0 %751
    %755 = vset.pattern.permute.xlu0 0
    %756 = vperm.xlu0 %755, %v706
    %v757 = vpop.permute.xlu0 %756
    %760 = vset.pattern.permute.xlu0 0
    %761 = vperm.xlu0 %760, %v707
    %v762 = vpop.permute.xlu0 %761
    %765 = vset.pattern.permute.xlu0 0
    %766 = vperm.xlu0 %765, %v708
    %v767 = vpop.permute.xlu0 %766
    %770 = vset.pattern.permute.xlu0 0
    %771 = vperm.xlu0 %770, %v709
    %v772 = vpop.permute.xlu0 %771
    %775 = vset.pattern.permute.xlu0 0
    %776 = vperm.xlu0 %775, %v710
    %v777 = vpop.permute.xlu0 %776
    %780 = vset.pattern.permute.xlu0 0
    %781 = vperm.xlu0 %780, %v711
    %v782 = vpop.permute.xlu0 %781
    %785 = vset.pattern.permute.xlu0 0
    %786 = vperm.xlu0 %785, %v712
    %v787 = vpop.permute.xlu0 %786
    %790 = vset.pattern.permute.xlu0 0
    %791 = vperm.xlu0 %790, %v713
    %v792 = vpop.permute.xlu0 %791
    %v810 = vunpack.c.l.b16 %v674
    %v811 = vunpack.c.l.b16 %v675
    %v812 = vunpack.c.l.b16 %v676
    %v813 = vunpack.c.l.b16 %v677
    %v814 = vunpack.c.l.b16 %v678
    %v815 = vunpack.c.l.b16 %v679
    %v816 = vunpack.c.l.b16 %v680
    %v817 = vunpack.c.l.b16 %v681
    %v818 = vunpack.c.l.b16 %v682
    %v819 = vunpack.c.l.b16 %v683
    %v820 = vunpack.c.l.b16 %v684
    %v821 = vunpack.c.l.b16 %v685
    %v822 = vunpack.c.l.b16 %v686
    %v823 = vunpack.c.l.b16 %v687
    %v824 = vunpack.c.l.b16 %v688
    %v825 = vunpack.c.l.b16 %v689
    %v826 = vpack.c.b16 %v811, %v810
    %v827 = vpack.c.b16 %v813, %v812
    %v828 = vpack.c.b16 %v815, %v814
    %v829 = vpack.c.b16 %v817, %v816
    %v830 = vpack.c.b16 %v819, %v818
    %v831 = vpack.c.b16 %v821, %v820
    %v832 = vpack.c.b16 %v823, %v822
    %v833 = vpack.c.b16 %v825, %v824
    %842 = vmatprep.subr.bf16.mxu0 0
    %843 = vmatpush1.bf16.msra.mxu0 %v697
    %844 = vmatprep.subr.bf16.mxu0 0
    %845 = vmatpush1.bf16.msra.mxu0 %v696
    %846 = vmatprep.subr.bf16.mxu0 0
    %847 = vmatpush1.bf16.msra.mxu0 %v695
    %848 = vmatprep.subr.bf16.mxu0 0
    %849 = vmatpush1.bf16.msra.mxu0 %v694
    %850 = vmatprep.subr.bf16.mxu0 0
    %851 = vmatpush1.bf16.msra.mxu0 %v693
    %852 = vmatprep.subr.bf16.mxu0 0
    %853 = vmatpush1.bf16.msra.mxu0 %v692
    %854 = vmatprep.subr.bf16.mxu0 0
    %855 = vmatpush1.bf16.msra.mxu0 %v691
    %856 = vmatprep.subr.bf16.mxu0 0
    %857 = vmatpush1.bf16.msra.mxu0 %v690
    %858 = vmatprep.subr.bf16.mxu0 0
    %859 = vmatpush2.bf16.msra.mxu0 0
    %860 = vmatprep.subr.bf16.mxu0 0
    %861 = vmatpush2.bf16.msra.mxu0 0
    %862 = vmatprep.subr.bf16.mxu0 0
    %863 = vmatpush2.bf16.msra.mxu0 0
    %864 = vmatprep.subr.bf16.mxu0 0
    %865 = vmatpush2.bf16.msra.mxu0 0
    %866 = vmatprep.subr.bf16.mxu0 0
    %867 = vmatpush2.bf16.msra.mxu0 0
    %868 = vmatprep.subr.bf16.mxu0 0
    %869 = vmatpush2.bf16.msra.mxu0 0
    %870 = vmatprep.subr.bf16.mxu0 0
    %871 = vmatpush2.bf16.msra.mxu0 0
    %872 = vmatprep.subr.bf16.mxu0 0
    %873 = vmatpush2.bf16.msra.mxu0 0
    %874 = vmatprep.mubr.bf16.mxu0 0
    %875 = vmatmul.mubr.bf16.gmra.mxu0 %v826
    %v876 = vpop.f32.mrf.mxu0
    %v877 = vadd.f32 %v717, %v876
    %v878 = vpop.f32.mrf.mxu0
    %v879 = vpop.f32.mrf.mxu0
    %v880 = vadd.f32 %v722, %v879
    %v881 = vpop.f32.mrf.mxu0
    %882 = vmatprep.mubr.bf16.mxu0 0
    %883 = vmatmul.mubr.bf16.gmra.mxu0 %v827
    %v884 = vpop.f32.mrf.mxu0
    %v885 = vadd.f32 %v727, %v884
    %v886 = vpop.f32.mrf.mxu0
    %v887 = vpop.f32.mrf.mxu0
    %v888 = vadd.f32 %v732, %v887
    %v889 = vpop.f32.mrf.mxu0
    %890 = vmatprep.mubr.bf16.mxu0 0
    %891 = vmatmul.mubr.bf16.gmra.mxu0 %v828
    %v892 = vpop.f32.mrf.mxu0
    %v893 = vadd.f32 %v737, %v892
    %v894 = vpop.f32.mrf.mxu0
    %v895 = vpop.f32.mrf.mxu0
    %v896 = vadd.f32 %v742, %v895
    %v897 = vpop.f32.mrf.mxu0
    %898 = vmatprep.mubr.bf16.mxu0 0
    %899 = vmatmul.mubr.bf16.gmra.mxu0 %v829
    %v900 = vpop.f32.mrf.mxu0
    %v901 = vadd.f32 %v747, %v900
    %v902 = vpop.f32.mrf.mxu0
    %v903 = vpop.f32.mrf.mxu0
    %v904 = vadd.f32 %v752, %v903
    %v905 = vpop.f32.mrf.mxu0
    %906 = vmatprep.mubr.bf16.mxu0 0
    %907 = vmatmul.mubr.bf16.gmra.mxu0 %v830
    %v908 = vpop.f32.mrf.mxu0
    %v909 = vadd.f32 %v757, %v908
    %v910 = vpop.f32.mrf.mxu0
    %v911 = vpop.f32.mrf.mxu0
    %v912 = vadd.f32 %v762, %v911
    %v913 = vpop.f32.mrf.mxu0
    %914 = vmatprep.mubr.bf16.mxu0 0
    %915 = vmatmul.mubr.bf16.gmra.mxu0 %v831
    %v916 = vpop.f32.mrf.mxu0
    %v917 = vadd.f32 %v767, %v916
    %v918 = vpop.f32.mrf.mxu0
    %v919 = vpop.f32.mrf.mxu0
    %v920 = vadd.f32 %v772, %v919
    %v921 = vpop.f32.mrf.mxu0
    %922 = vmatprep.mubr.bf16.mxu0 0
    %923 = vmatmul.mubr.bf16.gmra.mxu0 %v832
    %v924 = vpop.f32.mrf.mxu0
    %v925 = vadd.f32 %v777, %v924
    %v926 = vpop.f32.mrf.mxu0
    %v927 = vpop.f32.mrf.mxu0
    %v928 = vadd.f32 %v782, %v927
    %v929 = vpop.f32.mrf.mxu0
    %930 = vmatprep.mubr.bf16.mxu0 0
    %931 = vmatmul.mubr.bf16.gmra.mxu0 %v833
    %v932 = vpop.f32.mrf.mxu0
    %v933 = vadd.f32 %v787, %v932
    %v934 = vpop.f32.mrf.mxu0
    %v935 = vpop.f32.mrf.mxu0
    %v936 = vadd.f32 %v792, %v935
    %v937 = vpop.f32.mrf.mxu0
    %938 = vdwg.mxu0
    %v939 = vtanh.pop %v877
    %v940 = vtanh.pop %v880
    %v941 = vtanh.pop %v885
    %v942 = vtanh.pop %v888
    %v943 = vtanh.pop %v893
    %v944 = vtanh.pop %v896
    %v945 = vtanh.pop %v901
    %v946 = vtanh.pop %v904
    %v947 = vtanh.pop %v909
    %v948 = vtanh.pop %v912
    %v949 = vtanh.pop %v917
    %v950 = vtanh.pop %v920
    %v951 = vtanh.pop %v925
    %v952 = vtanh.pop %v928
    %v953 = vtanh.pop %v933
    %v954 = vtanh.pop %v936
    %v955 = vld [vmem:[%s9] sm:$0xff]
    %v956 = vld [vmem:[%s9 + $0x8] sm:$0xff]
    %v957 = vld [vmem:[%s9 + $0x10] sm:$0xff]
    %v958 = vld [vmem:[%s9 + $0x18] sm:$0xff]
    %v959 = vld [vmem:[%s9 + $0x20] sm:$0xff]
    %v960 = vld [vmem:[%s9 + $0x28] sm:$0xff]
    %v961 = vld [vmem:[%s9 + $0x30] sm:$0xff]
    %v962 = vld [vmem:[%s9 + $0x38] sm:$0xff]
    %v963 = vld [vmem:[%s9 + $0x40] sm:$0xff]
    %v964 = vld [vmem:[%s9 + $0x48] sm:$0xff]
    %v965 = vld [vmem:[%s9 + $0x50] sm:$0xff]
    %v966 = vld [vmem:[%s9 + $0x58] sm:$0xff]
    %v967 = vld [vmem:[%s9 + $0x60] sm:$0xff]
    %v968 = vld [vmem:[%s9 + $0x68] sm:$0xff]
    %v969 = vld [vmem:[%s9 + $0x70] sm:$0xff]
    %v970 = vld [vmem:[%s9 + $0x78] sm:$0xff]
    %972 = vset.pattern.permute.xlu0 0
    %973 = vperm.xlu0 %972, %v955
    %v974 = vpop.permute.xlu0 %973
    %977 = vset.pattern.permute.xlu0 0
    %978 = vperm.xlu0 %977, %v956
    %v979 = vpop.permute.xlu0 %978
    %982 = vset.pattern.permute.xlu0 0
    %983 = vperm.xlu0 %982, %v957
    %v984 = vpop.permute.xlu0 %983
    %987 = vset.pattern.permute.xlu0 0
    %988 = vperm.xlu0 %987, %v958
    %v989 = vpop.permute.xlu0 %988
    %992 = vset.pattern.permute.xlu0 0
    %993 = vperm.xlu0 %992, %v959
    %v994 = vpop.permute.xlu0 %993
    %997 = vset.pattern.permute.xlu0 0
    %998 = vperm.xlu0 %997, %v960
    %v999 = vpop.permute.xlu0 %998
    %1002 = vset.pattern.permute.xlu0 0
    %1003 = vperm.xlu0 %1002, %v961
    %v1004 = vpop.permute.xlu0 %1003
    %1007 = vset.pattern.permute.xlu0 0
    %1008 = vperm.xlu0 %1007, %v962
    %v1009 = vpop.permute.xlu0 %1008
    %1012 = vset.pattern.permute.xlu0 0
    %1013 = vperm.xlu0 %1012, %v963
    %v1014 = vpop.permute.xlu0 %1013
    %1017 = vset.pattern.permute.xlu0 0
    %1018 = vperm.xlu0 %1017, %v964
    %v1019 = vpop.permute.xlu0 %1018
    %1022 = vset.pattern.permute.xlu0 0
    %1023 = vperm.xlu0 %1022, %v965
    %v1024 = vpop.permute.xlu0 %1023
    %1027 = vset.pattern.permute.xlu0 0
    %1028 = vperm.xlu0 %1027, %v966
    %v1029 = vpop.permute.xlu0 %1028
    %1032 = vset.pattern.permute.xlu0 0
    %1033 = vperm.xlu0 %1032, %v967
    %v1034 = vpop.permute.xlu0 %1033
    %1037 = vset.pattern.permute.xlu0 0
    %1038 = vperm.xlu0 %1037, %v968
    %v1039 = vpop.permute.xlu0 %1038
    %1042 = vset.pattern.permute.xlu0 0
    %1043 = vperm.xlu0 %1042, %v969
    %v1044 = vpop.permute.xlu0 %1043
    %1047 = vset.pattern.permute.xlu0 0
    %1048 = vperm.xlu0 %1047, %v970
    %v1049 = vpop.permute.xlu0 %1048
    %v1051 = vmul.f32 %v974, %v939
    %v1052 = vmul.f32 %v979, %v940
    %v1053 = vmul.f32 %v984, %v941
    %v1054 = vmul.f32 %v989, %v942
    %v1055 = vmul.f32 %v994, %v943
    %v1056 = vmul.f32 %v999, %v944
    %v1057 = vmul.f32 %v1004, %v945
    %v1058 = vmul.f32 %v1009, %v946
    %v1059 = vmul.f32 %v1014, %v947
    %v1060 = vmul.f32 %v1019, %v948
    %v1061 = vmul.f32 %v1024, %v949
    %v1062 = vmul.f32 %v1029, %v950
    %v1063 = vmul.f32 %v1034, %v951
    %v1064 = vmul.f32 %v1039, %v952
    %v1065 = vmul.f32 %v1044, %v953
    %v1066 = vmul.f32 %v1049, %v954
    %v1067 = vadd.f32 %v1051, %v1052
    %v1068 = vadd.f32 %v1067, %v1053
    %v1069 = vadd.f32 %v1068, %v1054
    %v1070 = vadd.f32 %v1069, %v1055
    %v1071 = vadd.f32 %v1070, %v1056
    %v1072 = vadd.f32 %v1071, %v1057
    %v1073 = vadd.f32 %v1072, %v1058
    %v1074 = vadd.f32 %v1073, %v1059
    %v1075 = vadd.f32 %v1074, %v1060
    %v1076 = vadd.f32 %v1075, %v1061
    %v1077 = vadd.f32 %v1076, %v1062
    %v1078 = vadd.f32 %v1077, %v1063
    %v1079 = vadd.f32 %v1078, %v1064
    %v1080 = vadd.f32 %v1079, %v1065
    %v1081 = vadd.f32 %v1080, %v1066
    %v1082 = vrot.slane %v1081, 4
    %v1083 = vadd.f32 %v1081, %v1082
    %v1084 = vrot.slane %v1083, 2
    %v1085 = vadd.f32 %v1083, %v1084
    %v1086 = vrot.slane %v1085, 1
    %v1087 = vadd.f32 %v1085, %v1086
    %v1088 = vld [vmem:[#allocation2] sm:$0x1]
    %1090 = vset.pattern.permute.xlu0 0
    %1091 = vperm.xlu0 %1090, %v1088
    %v1092 = vpop.permute.xlu0 %1091
    %v1094 = vlaneseq
    %v1095 = vshrl.u32 %v1094, 7
    %v1096 = vsub.s32 0, %v1095
    %v1097 = vrot.slane %v1092, %v1096
    %v1098 = vadd.f32 %v1087, %v1097
    %1099 = vst [vmem:[#allocation3] sm:$0x1] %v1098
    // Predicated region
    $region46: #{tpu_custom_call.1} parent=1 // pred_check
      _
    $region47: #{tpu_custom_call.1} parent=1 // pred_check_branch
      %1101 = sbr.rel (0) target = $region49
    $region48: #{tpu_custom_call.1} parent=1 // pred_region
      %s1103 = ssub.s32 16, 16
      %1104 = vsyncadd [#allocation4], %s1103
      %s1106 = sshll.u32 [#allocation3], 4
      %s1107 = int_to_ptr.vmem [resolvable:$true] %s1106
      %1109 = dma.vmem_to_hbm [thread:$0]  %s1107, 16, %s11, [#allocation4]
    $region49: #{tpu_custom_call.1} parent=1 // pred_fallthru
      _
    // Predicated region
    $region50: #{tpu_custom_call.1} parent=1 // pred_check
      _
    $region51: #{tpu_custom_call.1} parent=1 // pred_check_branch
      %1111 = sbr.rel (0) target = $region53
    $region52: #{tpu_custom_call.1} parent=1 // pred_region
      %1112 = dma.done [#allocation4], 16
    $region53: #{tpu_custom_call.1} parent=1 // pred_fallthru
      _
    %1113 = vsyncpa [#allocation4], 1

</llo_original>
